<compile_context>
chip_gen: v7x
topology: tpu7x:2x2x1
jax: 0.10.0
libtpu: 0.0.40
codegen_flags: <defaults>
</compile_context>

<pallas_src>
import functools

import jax
import jax.numpy as jnp
from jax.experimental import pallas as pl
from jax.experimental.pallas import tpu as pltpu


def _round_up(x, m):
    return (x + m - 1) // m * m


_COMPILER_PARAMS = pltpu.CompilerParams(
    dimension_semantics=("parallel", "parallel"),
    vmem_limit_bytes=32 * 1024 * 1024,
)


def _pick_row_tile(H, W, *, target=512, multiple=1):
    """Pick a row-tile count t (multiple of `multiple`) with t*W ~= target rows
    such that the (t*W) sublane block dim is 8-aligned or covers the full extent."""
    t = max(multiple, -(-target // max(W, 1)))
    t -= t % multiple
    t = max(t, multiple)
    if t >= H:
        return H
    while t < H and (t * W) % 8 != 0:
        t += multiple
    return min(t, H)


# ----------------------------------------------------------------------------
# 1x1 conv kernels (pointwise matmul, fused bias; optional fused 2x-upsampled
# residual add)
# ----------------------------------------------------------------------------
def _mm_bias_kernel(x_ref, w_ref, b_ref, o_ref):
    # x_ref: (1, TM, Cin) bf16   w_ref: (Cin, N) bf16   b_ref: (1, N) f32
    acc = jnp.dot(x_ref[0], w_ref[...], preferred_element_type=jnp.float32)
    o_ref[...] = (acc + b_ref[...])[None].astype(o_ref.dtype)


def _mm_bias_addup2_kernel(x_ref, w_ref, b_ref, a_ref, o_ref):
    # Same as above + fused nearest-2x upsample of the half-resolution residual.
    # a_ref: (1, tr//2, W//2, N) bf16
    acc = jnp.dot(x_ref[0], w_ref[...], preferred_element_type=jnp.float32)
    acc = acc + b_ref[...]
    a = a_ref[0]                                   # (hr, wr, C)
    hr, wr, C = a.shape
    # W-duplication then H-duplication, all in VMEM (no HBM round trip).
    aw = jnp.broadcast_to(a[:, :, None, :], (hr, wr, 2, C)).reshape(hr, 2 * wr, C)
    ah = jnp.broadcast_to(aw[:, None, :, :], (hr, 2, 2 * wr, C))
    a_up = ah.reshape(2 * hr * 2 * wr, C)
    o_ref[...] = (acc + a_up.astype(jnp.float32))[None].astype(o_ref.dtype)


def conv1x1_pallas(x, w, b, *, tile_m=512):
    """1x1 conv, NHWC.  x:(B,H,W,Cin) bf16, w:(Cin,N) bf16, b:(1,N) f32."""
    B, H, W, Cin = x.shape
    N = w.shape[1]
    M = H * W
    tm = min(tile_m, M)
    xf = x.reshape(B, M, Cin)
    out = pl.pallas_call(
        _mm_bias_kernel,
        out_shape=jax.ShapeDtypeStruct((B, M, N), jnp.bfloat16),
        grid=(B, pl.cdiv(M, tm)),
        in_specs=[
            pl.BlockSpec((1, tm, Cin), lambda b_, m: (b_, m, 0)),
            pl.BlockSpec((Cin, N), lambda b_, m: (0, 0)),
            pl.BlockSpec((1, N), lambda b_, m: (0, 0)),
        ],
        out_specs=pl.BlockSpec((1, tm, N), lambda b_, m: (b_, m, 0)),
        compiler_params=_COMPILER_PARAMS,
    )(xf, w, b)
    return out.reshape(B, H, W, N)


def conv1x1_add_up2_pallas(x, w, b, add_half, *, tile_rows_target=512):
    """1x1 conv + fused nearest-2x-upsampled residual add.
    x: (B,H,W,Cin) bf16; add_half: (B,H//2,W//2,N) bf16."""
    B, H, W, Cin = x.shape
    N = w.shape[1]
    Bh, Hh, Wh, Nh = add_half.shape
    assert (Hh * 2, Wh * 2, Nh) == (H, W, N), "upsample requires exact 2x shapes"
    tr = _pick_row_tile(H, W, target=tile_rows_target, multiple=2)
    xf = x.reshape(B, H * W, Cin)
    out = pl.pallas_call(
        _mm_bias_addup2_kernel,
        out_shape=jax.ShapeDtypeStruct((B, H * W, N), jnp.bfloat16),
        grid=(B, pl.cdiv(H, tr)),
        in_specs=[
            pl.BlockSpec((1, tr * W, Cin), lambda b_, m: (b_, m, 0)),
            pl.BlockSpec((Cin, N), lambda b_, m: (0, 0)),
            pl.BlockSpec((1, N), lambda b_, m: (0, 0)),
            pl.BlockSpec((1, tr // 2, Wh, N), lambda b_, m: (b_, m, 0, 0)),
        ],
        out_specs=pl.BlockSpec((1, tr * W, N), lambda b_, m: (b_, m, 0)),
        compiler_params=_COMPILER_PARAMS,
    )(xf, w, b, add_half)
    return out.reshape(B, H, W, N)


# ----------------------------------------------------------------------------
# 3x3 conv kernel: padded image resident in VMEM, 9-tap in-kernel accumulation
# ----------------------------------------------------------------------------
def _conv3x3_kernel(x_ref, w_ref, b_ref, o_ref, *, th, w_out, stride, h_phase,
                    input_relu):
    # x_ref : (1, S2*Hph, Wph, Cin) bf16 -- phase-decomposed padded image (resident)
    # w_ref : (9, Cin, N) bf16   b_ref : (1, N) f32   o_ref : (1, th*w_out, N) bf16
    row0 = pl.multiple_of(pl.program_id(1) * th, th)
    cin = x_ref.shape[-1]
    n = o_ref.shape[-1]
    acc = jnp.zeros((th * w_out, n), jnp.float32)
    rows_cache = {}
    for dy in range(3):
        for dx in range(3):
            p = (dy % stride) * stride + (dx % stride)      # phase plane index
            ro, co = dy // stride, dx // stride             # offsets inside plane
            key = (p, ro)
            if key not in rows_cache:
                r = x_ref[0, pl.ds(row0 + p * h_phase + ro, th), :, :]
                if input_relu:
                    r = jnp.maximum(r, 0).astype(r.dtype)   # fused pre-ReLU (P7)
                rows_cache[key] = r                         # (th, Wph, Cin)
            patch = rows_cache[key][:, co:co + w_out, :].reshape(th * w_out, cin)
            acc = acc + jnp.dot(patch, w_ref[dy * 3 + dx],
                                preferred_element_type=jnp.float32)
    o_ref[...] = (acc + b_ref[...])[None].astype(o_ref.dtype)


def conv3x3_pallas(x, w, b, *, stride=1, input_relu=False, tile_rows_target=512):
    """3x3 conv, padding 1, stride 1 or 2, NHWC.
    x: (B,H,W,Cin) bf16; w: (3,3,Cin,N) bf16; b: (1,N) f32.
    The zero-padded activation is read from HBM exactly once per image (resident
    VMEM block); the 9 taps are accumulated in-kernel (no im2col)."""
    B, H, W, Cin = x.shape
    N = w.shape[-1]
    Ho = (H + 2 - 3) // stride + 1
    Wo = (W + 2 - 3) // stride + 1
    th = _pick_row_tile(Ho, Wo, target=tile_rows_target, multiple=1)
    n_m = pl.cdiv(Ho, th)

    # Phase-decompose the padded input so every tap is a contiguous window:
    # plane (py,px)[r,c] = xpad[stride*r+py, stride*c+px].  For stride=1 this is
    # just the padded image itself.
    ro_max = 2 // stride
    co_max = 2 // stride
    Hph = n_m * th + ro_max
    Wph = Wo + co_max
    pad_b = stride * Hph - (H + 1)
    pad_r = stride * Wph - (W + 1)
    xp = jnp.pad(x, ((0, 0), (1, pad_b), (1, pad_r), (0, 0)))
    xph = xp.reshape(B, Hph, stride, Wph, stride, Cin)
    xph = xph.transpose(0, 2, 4, 1, 3, 5).reshape(B, stride * stride * Hph, Wph, Cin)
    w9 = w.reshape(9, Cin, N)

    kernel = functools.partial(_conv3x3_kernel, th=th, w_out=Wo, stride=stride,
                               h_phase=Hph, input_relu=input_relu)
    out = pl.pallas_call(
        kernel,
        out_shape=jax.ShapeDtypeStruct((B, Ho * Wo, N), jnp.bfloat16),
        grid=(B, n_m),
        in_specs=[
            pl.BlockSpec((1, stride * stride * Hph, Wph, Cin),
                         lambda b_, m: (b_, 0, 0, 0)),      # resident across m
            pl.BlockSpec((9, Cin, N), lambda b_, m: (0, 0, 0)),
            pl.BlockSpec((1, N), lambda b_, m: (0, 0)),
        ],
        out_specs=pl.BlockSpec((1, th * Wo, N), lambda b_, m: (b_, m, 0)),
        compiler_params=_COMPILER_PARAMS,
    )(xph, w9, b)
    return out.reshape(B, Ho, Wo, N)


# ----------------------------------------------------------------------------
# PyramidFeatures forward (parameters built deterministically)
# ----------------------------------------------------------------------------
class PyramidFeaturesPallas:
    def __init__(self, C3_size, C4_size, C5_size, feature_size=256, key=None):
        if key is None:
            key = jax.random.PRNGKey(0)
        F = feature_size
        Fp = _round_up(F, 128)          # lane-dense Cout (full vst / MXU columns)
        self.F, self.Fp = F, Fp

        def conv_params(k, kh, kw, cin, cin_pad):
            kw_, kb_ = jax.random.split(k)
            w = jax.random.normal(kw_, (kh, kw, cin, F), jnp.float32) * 0.05
            b = jax.random.normal(kb_, (F,), jnp.float32) * 0.01
            # Zero-pad Cout -> Fp (padded channels stay exactly 0 through the
            # whole pyramid) and Cin -> cin_pad for layers fed by padded acts.
            w = jnp.pad(w, ((0, 0), (0, 0), (0, cin_pad - cin), (0, Fp - F)))
            b = jnp.pad(b, (0, Fp - F))
            if kh == 1 and kw == 1:
                w = w.reshape(cin_pad, Fp)
            return w.astype(jnp.bfloat16), b.reshape(1, Fp)   # bias stays f32

        ks = jax.random.split(key, 8)
        self.p5_1 = conv_params(ks[0], 1, 1, C5_size, C5_size)
        self.p5_2 = conv_params(ks[1], 3, 3, F, Fp)
        self.p4_1 = conv_params(ks[2], 1, 1, C4_size, C4_size)
        self.p4_2 = conv_params(ks[3], 3, 3, F, Fp)
        self.p3_1 = conv_params(ks[4], 1, 1, C3_size, C3_size)
        self.p3_2 = conv_params(ks[5], 3, 3, F, Fp)
        self.p6 = conv_params(ks[6], 3, 3, C5_size, C5_size)
        self.p7_2 = conv_params(ks[7], 3, 3, F, Fp)

    def __call__(self, inputs):
        C3, C4, C5 = inputs  # NCHW f32 (PyTorch convention)
        # Cast to bf16 before the layout transpose (halves transpose traffic).
        to_nhwc = lambda t: jnp.transpose(t.astype(jnp.bfloat16), (0, 2, 3, 1))
        c3, c4, c5 = to_nhwc(C3), to_nhwc(C4), to_nhwc(C5)

        p5_pre = conv1x1_pallas(c5, *self.p5_1)
        p5 = conv3x3_pallas(p5_pre, *self.p5_2)

        p4_pre = conv1x1_add_up2_pallas(c4, *self.p4_1, add_half=p5_pre)
        p4 = conv3x3_pallas(p4_pre, *self.p4_2)

        p3_pre = conv1x1_add_up2_pallas(c3, *self.p3_1, add_half=p4_pre)
        p3 = conv3x3_pallas(p3_pre, *self.p3_2)

        p6 = conv3x3_pallas(c5, *self.p6, stride=2)
        p7 = conv3x3_pallas(p6, *self.p7_2, stride=2, input_relu=True)

        F = self.F
        to_nchw = lambda t: jnp.transpose(t[..., :F], (0, 3, 1, 2)).astype(jnp.float32)
        return [to_nchw(p3), to_nchw(p4), to_nchw(p5), to_nchw(p6), to_nchw(p7)]


# ----------------------------------------------------------------------------
# Pure-JAX reference (same bf16 storage / f32 accumulation, padded-channel domain)
# ----------------------------------------------------------------------------
def _upsample2_ref(x):
    B, H, W, C = x.shape
    x = jnp.broadcast_to(x[:, :, None, :, None, :], (B, H, 2, W, 2, C))
    return x.reshape(B, 2 * H, 2 * W, C)


def _ref_conv(x, w, b, *, stride=1, input_relu=False, add=None):
    if input_relu:
        x = jnp.maximum(x, 0).astype(x.dtype)
    w4 = w.reshape(1, 1, *w.shape) if w.ndim == 2 else w
    pad = w4.shape[0] // 2
    y = jax.lax.conv_general_dilated(
        x.astype(jnp.bfloat16), w4.astype(jnp.bfloat16),
        window_strides=(stride, stride),
        padding=[(pad, pad), (pad, pad)],
        dimension_numbers=("NHWC", "HWIO", "NHWC"),
        preferred_element_type=jnp.float32,
    ) + b.astype(jnp.float32)
    if add is not None:
        y = y + add.astype(jnp.float32)
    return y.astype(jnp.bfloat16)


def _ref_forward(model, inputs):
    C3, C4, C5 = inputs
    to_nhwc = lambda t: jnp.transpose(t.astype(jnp.bfloat16), (0, 2, 3, 1))
    c3, c4, c5 = to_nhwc(C3), to_nhwc(C4), to_nhwc(C5)

    p5_pre = _ref_conv(c5, *model.p5_1)
    p5 = _ref_conv(p5_pre, *model.p5_2)
    p5_up = _upsample2_ref(p5_pre)

    p4_pre = _ref_conv(c4, *model.p4_1, add=p5_up)
    p4 = _ref_conv(p4_pre, *model.p4_2)
    p4_up = _upsample2_ref(p4_pre)

    p3_pre = _ref_conv(c3, *model.p3_1, add=p4_up)
    p3 = _ref_conv(p3_pre, *model.p3_2)

    p6 = _ref_conv(c5, *model.p6, stride=2)
    p7 = _ref_conv(p6, *model.p7_2, stride=2, input_relu=True)

    F = model.F
    to_nchw = lambda t: jnp.transpose(t[..., :F], (0, 3, 1, 2)).astype(jnp.float32)
    return [to_nchw(p3), to_nchw(p4), to_nchw(p5), to_nchw(p6), to_nchw(p7)]


if __name__ == "__main__":
    key = jax.random.PRNGKey(0)
    k3, k4, k5, kp = jax.random.split(key, 4)

    # Small deterministic pyramid: C3 16x16, C4 8x8, C5 4x4 (NCHW, f32)
    B = 2
    C3 = jax.random.normal(k3, (B, 4, 16, 16), jnp.float32)
    C4 = jax.random.normal(k4, (B, 6, 8, 8), jnp.float32)
    C5 = jax.random.normal(k5, (B, 8, 4, 4), jnp.float32)

    model = PyramidFeaturesPallas(C3_size=4, C4_size=6, C5_size=8,
                                  feature_size=32, key=kp)

    outs = jax.block_until_ready(model((C3, C4, C5)))
    refs = jax.block_until_ready(_ref_forward(model, (C3, C4, C5)))

    expected_shapes = [(B, 32, 16, 16), (B, 32, 8, 8), (B, 32, 4, 4),
                       (B, 32, 2, 2), (B, 32, 1, 1)]
    for o, r, s in zip(outs, refs, expected_shapes):
        assert o.shape == s, (o.shape, s)
        # bf16 storage between layers -> tolerance loosened vs a pure-f32 path
        assert jnp.allclose(o, r, atol=1e-2, rtol=2e-2), (
            float(jnp.max(jnp.abs(o - r))))

    print("KERNEL_OK")
</pallas_src>

<mosaic_0001>
module attributes {stable_mosaic.version = 11 : i64} {
  func.func @_mm_bias_kernel(%arg0: i32, %arg1: i32, %arg2: memref<1x16x8xbf16, #tpu.memory_space<vmem>>, %arg3: memref<8x128xbf16, #tpu.memory_space<vmem>>, %arg4: memref<1x128xf32, #tpu.memory_space<vmem>>, %arg5: memref<1x16x128xbf16, #tpu.memory_space<vmem>>) attributes {dimension_semantics = [#tpu.dimension_semantics<parallel>, #tpu.dimension_semantics<parallel>], iteration_bounds = array<i64: 2, 1>, scalar_prefetch = 0 : i64, scratch_operands = 0 : i64, tpu.core_type = #tpu.core_type<tc>, window_params = [{transform_indices = @transform_0, window_bounds = array<i64: 1, 16, 8>}, {pipeline_mode = #tpu.pipeline_mode<synchronous>, transform_indices = @transform_1, window_bounds = array<i64: 8, 128>}, {pipeline_mode = #tpu.pipeline_mode<synchronous>, transform_indices = @transform_2, window_bounds = array<i64: 1, 128>}, {transform_indices = @transform_3, window_bounds = array<i64: 1, 16, 128>}]} {
    %c0 = arith.constant 0 : index
    %c0_0 = arith.constant 0 : index
    %c0_1 = arith.constant 0 : index
    %0 = vector.load %arg2[%c0, %c0_0, %c0_1] : memref<1x16x8xbf16, #tpu.memory_space<vmem>>, vector<1x16x8xbf16>
    %1 = vector.shape_cast %0 : vector<1x16x8xbf16> to vector<16x8xbf16>
    %c0_2 = arith.constant 0 : index
    %c0_3 = arith.constant 0 : index
    %2 = vector.load %arg3[%c0_2, %c0_3] : memref<8x128xbf16, #tpu.memory_space<vmem>>, vector<8x128xbf16>
    %cst = arith.constant dense<0.000000e+00> : vector<16x128xf32>
    %3 = tpu.matmul %1, %2, %cst {dimension_numbers = #tpu.dot_dimension_numbers<[1], [0], [0], [1], [0, 0, 1, 1], [], []>} : vector<16x8xbf16>, vector<8x128xbf16>, vector<16x128xf32> -> vector<16x128xf32>
    %c0_4 = arith.constant 0 : index
    %c0_5 = arith.constant 0 : index
    %4 = vector.load %arg4[%c0_4, %c0_5] : memref<1x128xf32, #tpu.memory_space<vmem>>, vector<1x128xf32>
    %5 = vector.broadcast %4 : vector<1x128xf32> to vector<16x128xf32>
    %6 = arith.addf %3, %5 : vector<16x128xf32>
    %7 = vector.shape_cast %6 : vector<16x128xf32> to vector<1x16x128xf32>
    %8 = arith.truncf %7 : vector<1x16x128xf32> to vector<1x16x128xbf16>
    %c0_6 = arith.constant 0 : index
    %c0_7 = arith.constant 0 : index
    %c0_8 = arith.constant 0 : index
    %9 = vector.load %arg5[%c0_6, %c0_7, %c0_8] : memref<1x16x128xbf16, #tpu.memory_space<vmem>>, vector<1x16x128xbf16>
    tpu.vector_store %arg5[%c0_6, %c0_7, %c0_8], %8 {strides = array<i32>} : memref<1x16x128xbf16, #tpu.memory_space<vmem>>, vector<1x16x128xbf16>,
    return
  }
  func.func @transform_0(%arg0: i32, %arg1: i32) -> (i32, i32, i32) {
    %c0_i32 = arith.constant 0 : i32
    %c0_i32_0 = arith.constant 0 : i32
    return %arg0, %arg1, %c0_i32 : i32, i32, i32
  }
  func.func @transform_1(%arg0: i32, %arg1: i32) -> (i32, i32) {
    %c0_i32 = arith.constant 0 : i32
    %c0_i32_0 = arith.constant 0 : i32
    %c0_i32_1 = arith.constant 0 : i32
    return %c0_i32, %c0_i32_0 : i32, i32
  }
  func.func @transform_2(%arg0: i32, %arg1: i32) -> (i32, i32) {
    %c0_i32 = arith.constant 0 : i32
    %c0_i32_0 = arith.constant 0 : i32
    %c0_i32_1 = arith.constant 0 : i32
    return %c0_i32, %c0_i32_0 : i32, i32
  }
  func.func @transform_3(%arg0: i32, %arg1: i32) -> (i32, i32, i32) {
    %c0_i32 = arith.constant 0 : i32
    %c0_i32_0 = arith.constant 0 : i32
    return %arg0, %arg1, %c0_i32 : i32, i32, i32
  }
}

</mosaic_0001>

<llo_original>
// kernel: tpu_custom_call.1
$region0: #{tpu_custom_call.1}
  #allocation0 [shape = 'u32[]', space=smem, size = 0x4, offset = 0x4, fixed_abs, tag = 'smem constant byte address 0x4 - core index']
  #allocation1 [shape = 'u32[144,128]{1,0:T(1,128)}', space=vmem, size = 0x12000, scoped, tag = 'internal scratch']
  %s0 = inlined_call_operand.vmem [shape: bf16[2,16,8], index: 0, kind: input, shape index: {}]
  %s1 = inlined_call_operand.vmem [shape: bf16[8,128], index: 1, kind: input, shape index: {}]
  %s2 = inlined_call_operand.vmem [shape: f32[1,128], index: 2, kind: input, shape index: {}]
  %s3 = inlined_call_operand.hbm [shape: bf16[2,16,128], index: 3, kind: output, shape index: {}]
  %s4 = sld [smem:[#allocation0]]
  $region45: #{tpu_custom_call.1} parent=0
    _
  %s6 = ssub.s32 1, %s4
  %s7 = scalar_select 0, %s6, %s4
  $region1: #{tpu_custom_call.1} parent=0
    #allocation2 [shape = 'u8[8192]{0}', space=vmem, size = 0x2000, scoped, tag = 'output window, operand 0']
    #allocation3 [shape = 's32[2]{0}', space=sflag, size = 0x8, scoped, tag = 'scoped memory for tpu_custom_call.1']
    %8 = vsyncpa [#allocation3], 0
    %s9 = scalar_lea.sflag [#allocation3], 1
    %10 = vsyncpa %s9, 0
    loop: start=0, step=1, limit=4
    $region2: #{tpu_custom_call.1} parent=1 // loop_pre_header
      _
    $region3: #{tpu_custom_call.1} parent=1 // loop_header
      %s12 = sphi 0, %s16
      %p13 = scmp.ge.s32.totalorder %s12, 4
      %s19 = sphi 0, %s31
      %s20 = sphi 0, %s27
      %s21 = sphi 0, %s19
      %s22 = sphi 0, %s20
      %s23 = sphi 0, %s21
      %s24 = sphi 0, %s22
      %s36 = sphi 0, %s38
      %s39 = sphi 0, %s36
      %s40 = sphi 0, %s39
      %s56 = sphi 0, %s40
      %s60 = sphi 0, %s60
      %s62 = sphi 0, %s60
      %s63 = sphi 0, %s62
      %s77 = sphi 0, %s63
      %s81 = sphi 0, %s81
      %s83 = sphi 0, %s81
      %s84 = sphi 0, %s83
      %s98 = sphi 0, %s84
      %s106 = sphi 0, %s108
      %s109 = sphi 0, %s106
      %s110 = sphi 0, %s109
      %s126 = sphi 0, %s110
    $region4: #{tpu_custom_call.1} parent=1 // loop_header_branch
      %15 = sbr.rel (%p13) target = $region8
    $region5: #{tpu_custom_call.1} parent=1 // loop_body
      %s17 = ssub.s32 %s12, 1
      %s18 = ssub.s32 %s12, 2
      %s25 = sadd.s32 1, %s20
      %p26 = scmp.ge.s32.totalorder %s25, 1
      %s27 = scalar_select %p26, 0, %s25
      %s28 = sadd.s32 1, %s19
      %s29 = scalar_select %p26, %s28, %s19
      %p30 = scmp.ge.s32.totalorder %s29, 2
      %s31 = scalar_select %p30, 0, %s29
      %s32 = ssub.s32 %s19, %s31
      %s33 = ssub.s32 %s20, %s27
      %s34 = sor.u32 %s32, %s33
      %p35 = scmp.eq.s32.totalorder %s34, 0
      %s37 = sadd.s32 %s36, 1
      %s38 = scalar_select %p35, %s36, %s37
      %p41 = pneg %p35
      %p42 = scmp.eq.s32.totalorder %s12, 1
      %p43 = por %p41, %p42
      %p44 = scmp.ne.s32.totalorder %s36, %s39
      %p45 = scmp.eq.s32.totalorder %s12, 0
      %p46 = por %p44, %p45
      %p47 = scmp.ne.s32.totalorder %s36, %s39
      %p48 = scmp.eq.s32.totalorder %s17, 1
      %p49 = por %p47, %p48
      %p50 = scmp.ne.s32.totalorder %s39, %s40
      %p51 = scmp.eq.s32.totalorder %s17, 0
      %p52 = por %p50, %p51
      %p53 = scmp.ne.s32.totalorder %s39, %s40
      %p54 = scmp.eq.s32.totalorder %s18, 1
      %p55 = por %p53, %p54
      %p57 = scmp.ne.s32.totalorder %s40, %s56
      %p58 = scmp.eq.s32.totalorder %s18, 0
      %p59 = por %p57, %p58
      %s61 = sadd.s32 %s60, 1
      %p64 = scmp.eq.s32.totalorder %s12, 1
      %p65 = scmp.ne.s32.totalorder %s60, %s62
      %p66 = scmp.eq.s32.totalorder %s12, 0
      %p67 = por %p65, %p66
      %p68 = scmp.ne.s32.totalorder %s60, %s62
      %p69 = scmp.eq.s32.totalorder %s17, 1
      %p70 = por %p68, %p69
      %p71 = scmp.ne.s32.totalorder %s62, %s63
      %p72 = scmp.eq.s32.totalorder %s17, 0
      %p73 = por %p71, %p72
      %p74 = scmp.ne.s32.totalorder %s62, %s63
      %p75 = scmp.eq.s32.totalorder %s18, 1
      %p76 = por %p74, %p75
      %p78 = scmp.ne.s32.totalorder %s63, %s77
      %p79 = scmp.eq.s32.totalorder %s18, 0
      %p80 = por %p78, %p79
      %s82 = sadd.s32 %s81, 1
      %p85 = scmp.eq.s32.totalorder %s12, 1
      %p86 = scmp.ne.s32.totalorder %s81, %s83
      %p87 = scmp.eq.s32.totalorder %s12, 0
      %p88 = por %p86, %p87
      %p89 = scmp.ne.s32.totalorder %s81, %s83
      %p90 = scmp.eq.s32.totalorder %s17, 1
      %p91 = por %p89, %p90
      %p92 = scmp.ne.s32.totalorder %s83, %s84
      %p93 = scmp.eq.s32.totalorder %s17, 0
      %p94 = por %p92, %p93
      %p95 = scmp.ne.s32.totalorder %s83, %s84
      %p96 = scmp.eq.s32.totalorder %s18, 1
      %p97 = por %p95, %p96
      %p99 = scmp.ne.s32.totalorder %s84, %s98
      %p100 = scmp.eq.s32.totalorder %s18, 0
      %p101 = por %p99, %p100
      %s102 = ssub.s32 %s19, %s31
      %s103 = ssub.s32 %s20, %s27
      %s104 = sor.u32 %s102, %s103
      %p105 = scmp.eq.s32.totalorder %s104, 0
      %s107 = sadd.s32 %s106, 1
      %s108 = scalar_select %p105, %s106, %s107
      %p111 = pneg %p105
      %p112 = scmp.eq.s32.totalorder %s12, 1
      %p113 = por %p111, %p112
      %p114 = scmp.ne.s32.totalorder %s106, %s109
      %p115 = scmp.eq.s32.totalorder %s12, 0
      %p116 = por %p114, %p115
      %p117 = scmp.ne.s32.totalorder %s106, %s109
      %p118 = scmp.eq.s32.totalorder %s17, 1
      %p119 = por %p117, %p118
      %p120 = scmp.ne.s32.totalorder %s109, %s110
      %p121 = scmp.eq.s32.totalorder %s17, 0
      %p122 = por %p120, %p121
      %p123 = scmp.ne.s32.totalorder %s109, %s110
      %p124 = scmp.eq.s32.totalorder %s18, 1
      %p125 = por %p123, %p124
      %p127 = scmp.ne.s32.totalorder %s110, %s126
      %p128 = scmp.eq.s32.totalorder %s18, 0
      %p129 = por %p127, %p128
      %p130 = scmp.le.s32.totalorder 1, %s12
      %p131 = scmp.lt.s32.totalorder %s12, 3
      %p132 = pnand %p130, %p131
      %p133 = pneg %p132
      // Predicated region
      $region9: #{tpu_custom_call.1} parent=5 // pred_check
        _
      $region10: #{tpu_custom_call.1} parent=5 // pred_check_branch
        %135 = sbr.rel (%p132) target = $region12
      $region11: #{tpu_custom_call.1} parent=5 // pred_region
        %s136 = ssub.s32 %s12, 1
        // Predicated region
        $region13: #{tpu_custom_call.1} parent=11 // pred_check
          %p137 = pneg %p73
        $region14: #{tpu_custom_call.1} parent=11 // pred_check_branch
          %139 = sbr.rel (%p137) target = $region16
        $region15: #{tpu_custom_call.1} parent=11 // pred_region
          _
        $region16: #{tpu_custom_call.1} parent=11 // pred_fallthru
          _
        // Predicated region
        $region17: #{tpu_custom_call.1} parent=11 // pred_check
          %p140 = pneg %p94
        $region18: #{tpu_custom_call.1} parent=11 // pred_check_branch
          %142 = sbr.rel (%p140) target = $region20
        $region19: #{tpu_custom_call.1} parent=11 // pred_region
          _
        $region20: #{tpu_custom_call.1} parent=11 // pred_fallthru
          _
      $region12: #{tpu_custom_call.1} parent=5 // pred_fallthru
        _
      %p143 = scmp.lt.s32.totalorder %s12, 2
      // Predicated region
      $region21: #{tpu_custom_call.1} parent=5 // pred_check
        %p144 = pneg %p143
      $region22: #{tpu_custom_call.1} parent=5 // pred_check_branch
        %146 = sbr.rel (%p144) target = $region24
      $region23: #{tpu_custom_call.1} parent=5 // pred_region
        // Predicated region
        $region25: #{tpu_custom_call.1} parent=23 // pred_check
          %p147 = pneg %p46
        $region26: #{tpu_custom_call.1} parent=23 // pred_check_branch
          %149 = sbr.rel (%p147) target = $region28
        $region27: #{tpu_custom_call.1} parent=23 // pred_region
          %s150 = smul.u32 2, %s20
          %p151 = scmp.lt.s32.totalorder %s19, 1
          %s152 = scalar_select %p151, %s19, 1
          %p153 = scmp.lt.s32.totalorder %s150, 1
          %s154 = scalar_select %p153, %s150, 1
          %s155 = smul.addr %s152, 2
          %s156 = sadd.s32 %s154, %s155
          %s157 = smul.addr %s156, 4
          %s158 = scalar_lea.vmem %s0, %s157
          %s159 = smul.u32 2, %s20
        $region28: #{tpu_custom_call.1} parent=23 // pred_fallthru
          _
      $region24: #{tpu_custom_call.1} parent=5 // pred_fallthru
        _
      %p160 = scmp.le.s32.totalorder 1, %s12
      %p161 = scmp.lt.s32.totalorder %s12, 3
      %p162 = pnand %p160, %p161
      %p163 = pneg %p162
      // Predicated region
      $region29: #{tpu_custom_call.1} parent=5 // pred_check
        _
      $region30: #{tpu_custom_call.1} parent=5 // pred_check_branch
        %165 = sbr.rel (%p162) target = $region32
      $region31: #{tpu_custom_call.1} parent=5 // pred_region
        %s166 = ssub.s32 %s12, 1
        %s167 = smul.u32 2, %s22
        %p168 = scmp.lt.s32.totalorder %s21, 1
        %s169 = scalar_select %p168, %s21, 1
        %p170 = scmp.lt.s32.totalorder %s167, 1
        %s171 = scalar_select %p170, %s167, 1
        %s172 = smul.addr %s169, 2
        %s173 = sadd.s32 %s171, %s172
        %s174 = smul.addr %s173, 4
        %s175 = scalar_lea.vmem %s0, %s174
        %p176 = pneg %p52
        %p177 = pneg %p49
        %p178 = pneg %p73
        %p179 = pneg %p70
        %p180 = pneg %p94
        %p181 = pneg %p91
        %p182 = pneg %p122
        %p183 = pneg %p119
        %s184 = sand.u32 %s109, 1
        %s185 = scalar_lea.sflag [#allocation3], %s184
        %s186 = sand.u32 %s109, 1
        %s187 = smul.addr %s186, 8
        %s188 = scalar_lea.vmem [#allocation2], %s187
        %s189 = smul.u32 2, %s22
        %p190 = scmp.lt.s32.totalorder %s21, 1
        %s191 = scalar_select %p190, %s21, 1
        %p192 = scmp.lt.s32.totalorder %s189, 1
        %s193 = scalar_select %p192, %s189, 1
        %s194 = smul.addr %s191, 2
        %s195 = sadd.s32 %s193, %s194
        %s196 = smul.addr %s195, 4
        %s197 = scalar_lea.vmem %s0, %s196
        %s198 = smul.u32 2, %s22
        %s199 = smul.u32 2, %s22
        %v201 = vld [vmem:[%s197] sm:$0xf]
        %v202 = vld [vmem:[%s197 + $0x4] sm:$0xf]
        %v203 = vld [vmem:[%s1] sm:$0xf]
        %v204 = vld [vmem:[%s2] sm:$0x1]
        %v206 = vlaneseq
        %v207 = vshrl.u32 %v206, 7
        %v208 = vsub.s32 0, %v207
        %v209 = vrot.slane %v204, %v208
        %v213 = vunpack.c.l.b16 %v201
        %v214 = vunpack.c.l.b16 %v202
        %v215 = vpack.c.b16 %v214, %v213
        %vm216 = vcmask 64512
        %v218 = vsel %vm216, %v215, 0
        %vm220 = vcmask 1043456
        %v222 = vsel %vm220, %v203, 0
        %224 = vmatprep.subr.bf16.mxu0 0
        %225 = vmatpush1.bf16.msra.mxu0 %v222
        %226 = vmatprep.subr.bf16.mxu0 0
        %227 = vmatpush1.bf16.msra.mxu0 0
        %228 = vmatprep.subr.bf16.mxu0 0
        %229 = vmatpush1.bf16.msra.mxu0 0
        %230 = vmatprep.subr.bf16.mxu0 0
        %231 = vmatpush1.bf16.msra.mxu0 0
        %232 = vmatprep.subr.bf16.mxu0 0
        %233 = vmatpush1.bf16.msra.mxu0 0
        %234 = vmatprep.subr.bf16.mxu0 0
        %235 = vmatpush1.bf16.msra.mxu0 0
        %236 = vmatprep.subr.bf16.mxu0 0
        %237 = vmatpush1.bf16.msra.mxu0 0
        %238 = vmatprep.subr.bf16.mxu0 0
        %239 = vmatpush1.bf16.msra.mxu0 0
        %240 = vmatprep.subr.bf16.mxu0 0
        %241 = vmatpush1.bf16.msra.mxu0 0
        %242 = vmatprep.subr.bf16.mxu0 0
        %243 = vmatpush1.bf16.msra.mxu0 0
        %244 = vmatprep.subr.bf16.mxu0 0
        %245 = vmatpush1.bf16.msra.mxu0 0
        %246 = vmatprep.subr.bf16.mxu0 0
        %247 = vmatpush1.bf16.msra.mxu0 0
        %248 = vmatprep.subr.bf16.mxu0 0
        %249 = vmatpush1.bf16.msra.mxu0 0
        %250 = vmatprep.subr.bf16.mxu0 0
        %251 = vmatpush1.bf16.msra.mxu0 0
        %252 = vmatprep.subr.bf16.mxu0 0
        %253 = vmatpush1.bf16.msra.mxu0 0
        %254 = vmatprep.subr.bf16.mxu0 0
        %255 = vmatpush1.bf16.msra.mxu0 0
        %256 = vmatprep.mubr.bf16.mxu0 0
        %257 = vmatmul.mubr.bf16.gmra.mrb[0].mxu0 %v218
        %v258 = vpop.f32.mrb[0].mxu0
        %v259 = vadd.f32 %v209, %v258
        %v260 = vpop.f32.mrb[0].mxu0
        %v261 = vpop.f32.mrb[0].mxu0
        %v262 = vadd.f32 %v209, %v261
        %v263 = vpop.f32.mrb[0].mxu0
        %264 = vdwg.mxu0
        %v265 = vpack.c.bf16 %v262, %v259
        %v267 = vunpack.c.l.b16 %v265
        %v268 = vunpack.c.h.b16 %v265
        %v269 = vpack.c.b16 %v267, %v267
        %v270 = vpack.c.b16 %v268, %v268
        %273 = vst [vmem:[%s188] sm:$0xf] %v269
        %274 = vst [vmem:[%s188 + $0x4] sm:$0xf] %v270
        %s275 = sand.u32 %s109, 1
        %s276 = scalar_lea.sflag [#allocation3], %s275
        %s277 = sand.u32 %s109, 1
        %s278 = smul.addr %s277, 8
        %s279 = scalar_lea.vmem [#allocation2], %s278
        // Predicated region
        $region33: #{tpu_custom_call.1} parent=31 // pred_check
          %p280 = pneg %p119
        $region34: #{tpu_custom_call.1} parent=31 // pred_check_branch
          %282 = sbr.rel (%p280) target = $region36
        $region35: #{tpu_custom_call.1} parent=31 // pred_region
          %s283 = smul.u32 2, %s22
          %s285 = ssub.s32 128, 128
          %286 = vsyncadd %s276, %s285
          %s287 = smul.addr %s21, 2
          %s288 = sadd.s32 %s283, %s287
          %s289 = smul.addr %s288, 64
          %s290 = scalar_lea.hbm %s3, %s289
          %s291 = sshll.u32 %s279, 4
          %s292 = int_to_ptr.vmem [resolvable:$true] %s291
          %297 = dma.vmem_to_hbm [thread:$0]  %s292, 128, %s290, %s276, 64, 64, 4
        $region36: #{tpu_custom_call.1} parent=31 // pred_fallthru
          _
      $region32: #{tpu_custom_call.1} parent=5 // pred_fallthru
        _
      %p298 = scmp.le.s32.totalorder 2, %s12
      // Predicated region
      $region37: #{tpu_custom_call.1} parent=5 // pred_check
        %p299 = pneg %p298
      $region38: #{tpu_custom_call.1} parent=5 // pred_check_branch
        %301 = sbr.rel (%p299) target = $region40
      $region39: #{tpu_custom_call.1} parent=5 // pred_region
        %s302 = ssub.s32 %s12, 2
        // Predicated region
        $region41: #{tpu_custom_call.1} parent=39 // pred_check
          %p303 = pneg %p125
        $region42: #{tpu_custom_call.1} parent=39 // pred_check_branch
          %305 = sbr.rel (%p303) target = $region44
        $region43: #{tpu_custom_call.1} parent=39 // pred_region
          %s306 = sand.u32 %s110, 1
          %s307 = scalar_lea.sflag [#allocation3], %s306
          %s308 = sand.u32 %s110, 1
          %s309 = smul.addr %s308, 8
          %s310 = scalar_lea.vmem [#allocation2], %s309
          %311 = dma.done %s307, 128
        $region44: #{tpu_custom_call.1} parent=39 // pred_fallthru
          _
      $region40: #{tpu_custom_call.1} parent=5 // pred_fallthru
        _
    $region6: #{tpu_custom_call.1} parent=1 // loop_footer
      %s16 = sadd.s32 1, %s12
    $region7: #{tpu_custom_call.1} parent=1 // loop_footer_branch
      %11 = sbr.rel target = $region3
    $region8: #{tpu_custom_call.1} parent=1 // loop_exit
      _
    %312 = vsyncpa [#allocation3], 1
    %s313 = scalar_lea.sflag [#allocation3], 1
    %314 = vsyncpa %s313, 1

</llo_original>
